<compile_context>
chip_gen: v7x
topology: tpu7x:2x2x1
jax: 0.10.0
libtpu: 0.0.40
codegen_flags: <defaults>
</compile_context>

<pallas_src>
import functools

import jax
import jax.numpy as jnp
from jax.experimental import pallas as pl
from jax.experimental.pallas import tpu as pltpu


def _round_up(n, m):
    return ((n + m - 1) // m) * m


def actor_mlp_kernel(x_ref, w1_ref, b1_ref, w2_ref, b2_ref, w3_ref, b3_ref, o_ref):
    compute_dtype = w1_ref.dtype  # bf16 (or f32) matmul operand dtype

    # x arrives as raw f32 (B_tile, in_dim); cast in-kernel (cheap VPU op)
    # instead of materializing a padded/converted copy in HBM.
    x = x_ref[...].astype(compute_dtype)

    # fc1 + ReLU : MXU matmul accumulates in f32, bias/ReLU epilogue in f32.
    z1 = jnp.dot(x, w1_ref[...], preferred_element_type=jnp.float32) + b1_ref[...]
    h1 = jnp.maximum(z1, 0.0).astype(compute_dtype)

    # fc2 + ReLU
    z2 = jnp.dot(h1, w2_ref[...], preferred_element_type=jnp.float32) + b2_ref[...]
    h2 = jnp.maximum(z2, 0.0).astype(compute_dtype)

    # fc3: W3/b3 were pre-scaled by 0.5, so (relu(z)+1)/2 == relu(0.5*z) + 0.5
    z3 = jnp.dot(h2, w3_ref[...], preferred_element_type=jnp.float32) + b3_ref[...]
    o_ref[...] = (jnp.maximum(z3, 0.0) + 0.5).astype(o_ref.dtype)


def actor_network_forward(x, params, *, tile_b=1024, latency_batch=256):
    """x: [B, input_dim] float32; params: output of prepare_params()."""
    w1, b1, w2, b2, w3, b3 = (
        params["w1"], params["b1"], params["w2"], params["b2"], params["w3"], params["b3"],
    )
    B, in_dim = x.shape
    assert in_dim == w1.shape[0], "input feature dim must match W1"
    out_dim = w3.shape[1]

    if B <= latency_batch:
        # Latency path: single invocation, no grid -> no per-step pipeline
        # prologue/epilogue. Everything lives in VMEM as full blocks.
        vmem = pl.BlockSpec(memory_space=pltpu.MemorySpace.VMEM)
        return pl.pallas_call(
            actor_mlp_kernel,
            out_shape=jax.ShapeDtypeStruct((B, out_dim), jnp.float32),
            in_specs=[vmem] * 7,
            out_specs=vmem,
        )(x, w1, b1, w2, b2, w3, b3)

    # Throughput path: tile the batch, keep weights resident across tiles
    # (constant block index => weights DMA'd once). Ensure at least 2 tiles so
    # v7x's two TensorCores both get work; cap at tile_b for large batches.
    tb = min(tile_b, max(8, _round_up(pl.cdiv(B, 2), 8)))
    grid = (pl.cdiv(B, tb),)  # ragged final block: OOB reads discarded via masked writes

    resident = lambda arr: pl.BlockSpec(arr.shape, lambda i: (0,) * arr.ndim)
    return pl.pallas_call(
        actor_mlp_kernel,
        out_shape=jax.ShapeDtypeStruct((B, out_dim), jnp.float32),
        grid=grid,
        in_specs=[
            pl.BlockSpec((tb, in_dim), lambda i: (i, 0)),   # raw f32 x, K = in_dim
            resident(w1), resident(b1),
            resident(w2), resident(b2),
            resident(w3), resident(b3),
        ],
        out_specs=pl.BlockSpec((tb, out_dim), lambda i: (i, 0)),
        compiler_params=pltpu.CompilerParams(
            # "parallel" lets v7x shard batch tiles across its 2 TensorCores.
            dimension_semantics=("parallel",),
        ),
    )(x, w1, b1, w2, b2, w3, b3)


def prepare_params(params, *, compute_dtype=jnp.bfloat16):
    """One-time transform of raw (f32, [in,out]) params into kernel-ready params.

    - folds the final (h+1)/2 into W3/b3 (ReLU positive homogeneity; exact)
    - casts matmul operands (weights) to `compute_dtype`; biases stay f32
    """
    w1, b1 = params["w1"], params["b1"]
    w2, b2 = params["w2"], params["b2"]
    w3, b3 = params["w3"], params["b3"]

    w3 = w3 * 0.5
    b3 = b3 * 0.5

    return {
        "w1": w1.astype(compute_dtype), "b1": b1.astype(jnp.float32),
        "w2": w2.astype(compute_dtype), "b2": b2.astype(jnp.float32),
        "w3": w3.astype(compute_dtype), "b3": b3.astype(jnp.float32),
    }


def init_params(key, input_dim, output_dim, hidden_dim=128):
    """Deterministic init mimicking nn.Linear's U(-1/sqrt(fan_in), 1/sqrt(fan_in)).

    Weights are stored as [in_features, out_features] (transpose of PyTorch's
    [out, in]) so the kernel can do x @ W directly.
    """
    def linear(k, fan_in, fan_out):
        kw, kb = jax.random.split(k)
        bound = 1.0 / jnp.sqrt(fan_in)
        w = jax.random.uniform(kw, (fan_in, fan_out), jnp.float32, -bound, bound)
        b = jax.random.uniform(kb, (1, fan_out), jnp.float32, -bound, bound)
        return w, b

    k1, k2, k3 = jax.random.split(key, 3)
    w1, b1 = linear(k1, input_dim, hidden_dim)
    w2, b2 = linear(k2, hidden_dim, hidden_dim)
    w3, b3 = linear(k3, hidden_dim, output_dim)
    return {"w1": w1, "b1": b1, "w2": w2, "b2": b2, "w3": w3, "b3": b3}


def reference_forward(x, params):
    h1 = jnp.maximum(x @ params["w1"] + params["b1"], 0.0)
    h2 = jnp.maximum(h1 @ params["w2"] + params["b2"], 0.0)
    h3 = jnp.maximum(h2 @ params["w3"] + params["b3"], 0.0)
    return (h3 + 1.0) / 2.0


if __name__ == "__main__":
    batch = 2
    input_dim = 16
    hidden_dim = 128
    output_dim = 8

    key = jax.random.PRNGKey(0)
    kx, kp = jax.random.split(key)
    x = jax.random.normal(kx, (batch, input_dim), jnp.float32)
    params = init_params(kp, input_dim, output_dim, hidden_dim)
    ref = reference_forward(x, params)

    fwd = jax.jit(functools.partial(actor_network_forward, tile_b=1024))

    # 1) f32 operands, grid-less latency path: tight numerical check.
    p_f32 = prepare_params(params, compute_dtype=jnp.float32)
    out_f32 = jax.block_until_ready(fwd(x, p_f32))
    assert out_f32.shape == (batch, output_dim)
    assert jnp.allclose(out_f32, ref, atol=1e-4, rtol=1e-4), "f32 kernel mismatch vs reference"

    # 2) bf16 operands (optimized path), same wrapper: loose check vs f32 reference.
    p_bf16 = prepare_params(params, compute_dtype=jnp.bfloat16)
    out_bf16 = jax.block_until_ready(fwd(x, p_bf16))
    assert out_bf16.shape == (batch, output_dim)
    assert jnp.allclose(out_bf16, ref, atol=5e-2, rtol=5e-2), "bf16 kernel mismatch vs reference"

    # 3) B=512 exercises the batch-tiled "parallel" grid (>=2 tiles for v7x,
    #    weights resident across tiles).
    big_b = 512
    xb = jax.random.normal(jax.random.PRNGKey(1), (big_b, input_dim), jnp.float32)
    refb = reference_forward(xb, params)
    outb = jax.block_until_ready(fwd(xb, p_bf16))
    assert outb.shape == (big_b, output_dim)
    assert jnp.allclose(outb, refb, atol=5e-2, rtol=5e-2), "tiled bf16 kernel mismatch vs reference"

    # 4) Ragged batch (not a multiple of the tile): exercises masked final-block
    #    writes with no wrapper-side pad/slice.
    rag_b = 700
    xr = jax.random.normal(jax.random.PRNGKey(2), (rag_b, input_dim), jnp.float32)
    refr = reference_forward(xr, params)
    outr = jax.block_until_ready(fwd(xr, p_bf16))
    assert outr.shape == (rag_b, output_dim)
    assert jnp.allclose(outr, refr, atol=5e-2, rtol=5e-2), "ragged bf16 kernel mismatch vs reference"

    print("KERNEL_OK")
</pallas_src>

<mosaic_0001>
module attributes {stable_mosaic.version = 11 : i64} {
  func.func @actor_mlp_kernel(%arg0: memref<2x16xf32, #tpu.memory_space<vmem>>, %arg1: memref<16x128xf32, #tpu.memory_space<vmem>>, %arg2: memref<1x128xf32, #tpu.memory_space<vmem>>, %arg3: memref<128x128xf32, #tpu.memory_space<vmem>>, %arg4: memref<1x128xf32, #tpu.memory_space<vmem>>, %arg5: memref<128x8xf32, #tpu.memory_space<vmem>>, %arg6: memref<1x8xf32, #tpu.memory_space<vmem>>, %arg7: memref<2x8xf32, #tpu.memory_space<vmem>>) attributes {dimension_semantics = [], scalar_prefetch = 0 : i64, scratch_operands = 0 : i64, tpu.core_type = #tpu.core_type<tc>} {
    %c0 = arith.constant 0 : index
    %c0_0 = arith.constant 0 : index
    %0 = vector.load %arg0[%c0, %c0_0] : memref<2x16xf32, #tpu.memory_space<vmem>>, vector<2x16xf32>
    %c0_1 = arith.constant 0 : index
    %c0_2 = arith.constant 0 : index
    %1 = vector.load %arg1[%c0_1, %c0_2] : memref<16x128xf32, #tpu.memory_space<vmem>>, vector<16x128xf32>
    %cst = arith.constant dense<0.000000e+00> : vector<2x128xf32>
    %2 = tpu.matmul %0, %1, %cst {dimension_numbers = #tpu.dot_dimension_numbers<[1], [0], [0], [1], [0, 0, 1, 1], [], []>} : vector<2x16xf32>, vector<16x128xf32>, vector<2x128xf32> -> vector<2x128xf32>
    %c0_3 = arith.constant 0 : index
    %c0_4 = arith.constant 0 : index
    %3 = vector.load %arg2[%c0_3, %c0_4] : memref<1x128xf32, #tpu.memory_space<vmem>>, vector<1x128xf32>
    %4 = vector.broadcast %3 : vector<1x128xf32> to vector<2x128xf32>
    %5 = arith.addf %2, %4 : vector<2x128xf32>
    %cst_5 = arith.constant 0.000000e+00 : f32
    %6 = vector.broadcast %cst_5 : f32 to vector<2x128xf32>
    %7 = arith.maximumf %5, %6 : vector<2x128xf32>
    %c0_6 = arith.constant 0 : index
    %c0_7 = arith.constant 0 : index
    %8 = vector.load %arg3[%c0_6, %c0_7] : memref<128x128xf32, #tpu.memory_space<vmem>>, vector<128x128xf32>
    %cst_8 = arith.constant dense<0.000000e+00> : vector<2x128xf32>
    %9 = tpu.matmul %7, %8, %cst_8 {dimension_numbers = #tpu.dot_dimension_numbers<[1], [0], [0], [1], [0, 0, 1, 1], [], []>} : vector<2x128xf32>, vector<128x128xf32>, vector<2x128xf32> -> vector<2x128xf32>
    %c0_9 = arith.constant 0 : index
    %c0_10 = arith.constant 0 : index
    %10 = vector.load %arg4[%c0_9, %c0_10] : memref<1x128xf32, #tpu.memory_space<vmem>>, vector<1x128xf32>
    %11 = vector.broadcast %10 : vector<1x128xf32> to vector<2x128xf32>
    %12 = arith.addf %9, %11 : vector<2x128xf32>
    %cst_11 = arith.constant 0.000000e+00 : f32
    %13 = vector.broadcast %cst_11 : f32 to vector<2x128xf32>
    %14 = arith.maximumf %12, %13 : vector<2x128xf32>
    %c0_12 = arith.constant 0 : index
    %c0_13 = arith.constant 0 : index
    %15 = vector.load %arg5[%c0_12, %c0_13] : memref<128x8xf32, #tpu.memory_space<vmem>>, vector<128x8xf32>
    %cst_14 = arith.constant dense<0.000000e+00> : vector<2x8xf32>
    %16 = tpu.matmul %14, %15, %cst_14 {dimension_numbers = #tpu.dot_dimension_numbers<[1], [0], [0], [1], [0, 0, 1, 1], [], []>} : vector<2x128xf32>, vector<128x8xf32>, vector<2x8xf32> -> vector<2x8xf32>
    %c0_15 = arith.constant 0 : index
    %c0_16 = arith.constant 0 : index
    %17 = vector.load %arg6[%c0_15, %c0_16] : memref<1x8xf32, #tpu.memory_space<vmem>>, vector<1x8xf32>
    %18 = vector.broadcast %17 : vector<1x8xf32> to vector<2x8xf32>
    %19 = arith.addf %16, %18 : vector<2x8xf32>
    %cst_17 = arith.constant 0.000000e+00 : f32
    %20 = vector.broadcast %cst_17 : f32 to vector<2x8xf32>
    %21 = arith.maximumf %19, %20 : vector<2x8xf32>
    %cst_18 = arith.constant 5.000000e-01 : f32
    %22 = vector.broadcast %cst_18 : f32 to vector<2x8xf32>
    %23 = arith.addf %21, %22 : vector<2x8xf32>
    %c0_19 = arith.constant 0 : index
    %c0_20 = arith.constant 0 : index
    %24 = vector.load %arg7[%c0_19, %c0_20] : memref<2x8xf32, #tpu.memory_space<vmem>>, vector<2x8xf32>
    tpu.vector_store %arg7[%c0_19, %c0_20], %23 {strides = array<i32>} : memref<2x8xf32, #tpu.memory_space<vmem>>, vector<2x8xf32>,
    return
  }
}

</mosaic_0001>

<llo_original>
// kernel: actor_network_forward.1
$region0: #{actor_network_forward.1}
  #allocation0 [shape = 'u32[]', space=smem, size = 0x4, offset = 0x4, fixed_abs, tag = 'smem constant byte address 0x4 - core index']
  #allocation1 [shape = 'u32[144,128]{1,0:T(1,128)}', space=vmem, size = 0x12000, scoped, tag = 'internal scratch']
  %s0 = inlined_call_operand.vmem [shape: f32[2,16], index: 0, kind: input, shape index: {}]
  %s1 = inlined_call_operand.vmem [shape: f32[16,128], index: 1, kind: input, shape index: {}]
  %s2 = inlined_call_operand.vmem [shape: f32[1,128], index: 2, kind: input, shape index: {}]
  %s3 = inlined_call_operand.vmem [shape: f32[128,128], index: 3, kind: input, shape index: {}]
  %s4 = inlined_call_operand.vmem [shape: f32[1,128], index: 4, kind: input, shape index: {}]
  %s5 = inlined_call_operand.vmem [shape: f32[128,8], index: 5, kind: input, shape index: {}]
  %s6 = inlined_call_operand.vmem [shape: f32[1,8], index: 6, kind: input, shape index: {}]
  %s7 = inlined_call_operand.hbm [shape: f32[2,8], index: 7, kind: output, shape index: {}]
  %s8 = sld [smem:[#allocation0]]
  $region38: #{actor_network_forward.1} parent=0
    _
  %s10 = ssub.s32 1, %s8
  %s11 = scalar_select 0, %s10, %s8
  $region1: #{actor_network_forward.1} parent=0
    #allocation2 [shape = 'u8[1024]{0}', space=vmem, size = 0x400, scoped, tag = 'output window, operand 0, single buffered']
    #allocation3 [shape = 's32[1]{0}', space=sflag, size = 0x4, scoped, tag = 'scoped memory for actor_network_forward.1']
    %12 = vsyncpa [#allocation3], 0
    // Predicated region
    $region2: #{actor_network_forward.1} parent=1 // pred_check
      _
    $region3: #{actor_network_forward.1} parent=1 // pred_check_branch
      %14 = sbr.rel (0) target = $region5
    $region4: #{actor_network_forward.1} parent=1 // pred_region
      _
    $region5: #{actor_network_forward.1} parent=1 // pred_fallthru
      _
    // Predicated region
    $region6: #{actor_network_forward.1} parent=1 // pred_check
      _
    $region7: #{actor_network_forward.1} parent=1 // pred_check_branch
      %16 = sbr.rel (0) target = $region9
    $region8: #{actor_network_forward.1} parent=1 // pred_region
      _
    $region9: #{actor_network_forward.1} parent=1 // pred_fallthru
      _
    // Predicated region
    $region10: #{actor_network_forward.1} parent=1 // pred_check
      _
    $region11: #{actor_network_forward.1} parent=1 // pred_check_branch
      %18 = sbr.rel (0) target = $region13
    $region12: #{actor_network_forward.1} parent=1 // pred_region
      _
    $region13: #{actor_network_forward.1} parent=1 // pred_fallthru
      _
    // Predicated region
    $region14: #{actor_network_forward.1} parent=1 // pred_check
      _
    $region15: #{actor_network_forward.1} parent=1 // pred_check_branch
      %20 = sbr.rel (0) target = $region17
    $region16: #{actor_network_forward.1} parent=1 // pred_region
      _
    $region17: #{actor_network_forward.1} parent=1 // pred_fallthru
      _
    // Predicated region
    $region18: #{actor_network_forward.1} parent=1 // pred_check
      _
    $region19: #{actor_network_forward.1} parent=1 // pred_check_branch
      %22 = sbr.rel (0) target = $region21
    $region20: #{actor_network_forward.1} parent=1 // pred_region
      _
    $region21: #{actor_network_forward.1} parent=1 // pred_fallthru
      _
    // Predicated region
    $region22: #{actor_network_forward.1} parent=1 // pred_check
      _
    $region23: #{actor_network_forward.1} parent=1 // pred_check_branch
      %24 = sbr.rel (0) target = $region25
    $region24: #{actor_network_forward.1} parent=1 // pred_region
      _
    $region25: #{actor_network_forward.1} parent=1 // pred_fallthru
      _
    // Predicated region
    $region26: #{actor_network_forward.1} parent=1 // pred_check
      _
    $region27: #{actor_network_forward.1} parent=1 // pred_check_branch
      %26 = sbr.rel (0) target = $region29
    $region28: #{actor_network_forward.1} parent=1 // pred_region
      _
    $region29: #{actor_network_forward.1} parent=1 // pred_fallthru
      _
    %v27 = vld [vmem:[%s0] sm:$0x3]
    %v28 = vld [vmem:[%s1] sm:$0xff]
    %v29 = vld [vmem:[%s1 + $0x8] sm:$0xff]
    %v30 = vld [vmem:[%s2] sm:$0x1]
    %v32 = vlaneseq
    %v33 = vshrl.u32 %v32, 7
    %v34 = vsub.s32 0, %v33
    %v35 = vrot.slane %v30, %v34
    %vm37 = vcmask 130048
    %v39 = vsel %vm37, %v27, 0
    %41 = vmatprep.subr.mxu0 0.0
    %42 = vmatpush1.msra.mxu0 %v28
    %43 = vmatprep.subr.mxu0 0.0
    %44 = vmatpush1.msra.mxu0 %v29
    %45 = vmatprep.subr.mxu0 0.0
    %46 = vmatpush1.msra.mxu0 0.0
    %47 = vmatprep.subr.mxu0 0.0
    %48 = vmatpush1.msra.mxu0 0.0
    %49 = vmatprep.subr.mxu0 0.0
    %50 = vmatpush1.msra.mxu0 0.0
    %51 = vmatprep.subr.mxu0 0.0
    %52 = vmatpush1.msra.mxu0 0.0
    %53 = vmatprep.subr.mxu0 0.0
    %54 = vmatpush1.msra.mxu0 0.0
    %55 = vmatprep.subr.mxu0 0.0
    %56 = vmatpush1.msra.mxu0 0.0
    %57 = vmatprep.subr.mxu0 0.0
    %58 = vmatpush1.msra.mxu0 0.0
    %59 = vmatprep.subr.mxu0 0.0
    %60 = vmatpush1.msra.mxu0 0.0
    %61 = vmatprep.subr.mxu0 0.0
    %62 = vmatpush1.msra.mxu0 0.0
    %63 = vmatprep.subr.mxu0 0.0
    %64 = vmatpush1.msra.mxu0 0.0
    %65 = vmatprep.subr.mxu0 0.0
    %66 = vmatpush1.msra.mxu0 0.0
    %67 = vmatprep.subr.mxu0 0.0
    %68 = vmatpush1.msra.mxu0 0.0
    %69 = vmatprep.subr.mxu0 0.0
    %70 = vmatpush1.msra.mxu0 0.0
    %71 = vmatprep.subr.mxu0 0.0
    %72 = vmatpush1.msra.mxu0 0.0
    %73 = vmatprep.subr.mxu0 0.0
    %74 = vmatpush1.msra.mxu0 0.0
    %75 = vmatprep.subr.mxu0 0.0
    %76 = vmatpush1.msra.mxu0 0.0
    %77 = vmatprep.subr.mxu0 0.0
    %78 = vmatpush1.msra.mxu0 0.0
    %79 = vmatprep.subr.mxu0 0.0
    %80 = vmatpush1.msra.mxu0 0.0
    %81 = vmatprep.subr.mxu0 0.0
    %82 = vmatpush1.msra.mxu0 0.0
    %83 = vmatprep.subr.mxu0 0.0
    %84 = vmatpush1.msra.mxu0 0.0
    %85 = vmatprep.subr.mxu0 0.0
    %86 = vmatpush1.msra.mxu0 0.0
    %87 = vmatprep.subr.mxu0 0.0
    %88 = vmatpush1.msra.mxu0 0.0
    %89 = vmatprep.subr.mxu0 0.0
    %90 = vmatpush1.msra.mxu0 0.0
    %91 = vmatprep.subr.mxu0 0.0
    %92 = vmatpush1.msra.mxu0 0.0
    %93 = vmatprep.subr.mxu0 0.0
    %94 = vmatpush1.msra.mxu0 0.0
    %95 = vmatprep.subr.mxu0 0.0
    %96 = vmatpush1.msra.mxu0 0.0
    %97 = vmatprep.subr.mxu0 0.0
    %98 = vmatpush1.msra.mxu0 0.0
    %99 = vmatprep.subr.mxu0 0.0
    %100 = vmatpush1.msra.mxu0 0.0
    %101 = vmatprep.subr.mxu0 0.0
    %102 = vmatpush1.msra.mxu0 0.0
    %103 = vmatprep.subr.mxu0 0.0
    %104 = vmatpush1.msra.mxu0 0.0
    %105 = vmatprep.mubr.f32.mxu0 0.0
    %106 = vmatmul.mubr.f32.gmra.mrb[0].mxu0 %v39
    %v107 = vpop.f32.mrb[0].mxu0
    %v108 = vadd.f32 %v35, %v107
    %v109 = vpop.f32.mrb[0].mxu0
    %110 = vdwg.mxu0
    %v111 = vmax.f32 %v108, 0.0
    %v112 = vld [vmem:[%s3] sm:$0xff]
    %v113 = vld [vmem:[%s3 + $0x8] sm:$0xff]
    %v114 = vld [vmem:[%s3 + $0x10] sm:$0xff]
    %v115 = vld [vmem:[%s3 + $0x18] sm:$0xff]
    %v116 = vld [vmem:[%s3 + $0x20] sm:$0xff]
    %v117 = vld [vmem:[%s3 + $0x28] sm:$0xff]
    %v118 = vld [vmem:[%s3 + $0x30] sm:$0xff]
    %v119 = vld [vmem:[%s3 + $0x38] sm:$0xff]
    %v120 = vld [vmem:[%s3 + $0x40] sm:$0xff]
    %v121 = vld [vmem:[%s3 + $0x48] sm:$0xff]
    %v122 = vld [vmem:[%s3 + $0x50] sm:$0xff]
    %v123 = vld [vmem:[%s3 + $0x58] sm:$0xff]
    %v124 = vld [vmem:[%s3 + $0x60] sm:$0xff]
    %v125 = vld [vmem:[%s3 + $0x68] sm:$0xff]
    %v126 = vld [vmem:[%s3 + $0x70] sm:$0xff]
    %v127 = vld [vmem:[%s3 + $0x78] sm:$0xff]
    %v128 = vld [vmem:[%s4] sm:$0x1]
    %v130 = vlaneseq
    %v131 = vshrl.u32 %v130, 7
    %v132 = vsub.s32 0, %v131
    %v133 = vrot.slane %v128, %v132
    %135 = vmatprep.subr.mxu0 0.0
    %136 = vmatpush1.msra.mxu0 %v112
    %137 = vmatprep.subr.mxu0 0.0
    %138 = vmatpush1.msra.mxu0 %v113
    %139 = vmatprep.subr.mxu0 0.0
    %140 = vmatpush1.msra.mxu0 %v114
    %141 = vmatprep.subr.mxu0 0.0
    %142 = vmatpush1.msra.mxu0 %v115
    %143 = vmatprep.subr.mxu0 0.0
    %144 = vmatpush1.msra.mxu0 %v116
    %145 = vmatprep.subr.mxu0 0.0
    %146 = vmatpush1.msra.mxu0 %v117
    %147 = vmatprep.subr.mxu0 0.0
    %148 = vmatpush1.msra.mxu0 %v118
    %149 = vmatprep.subr.mxu0 0.0
    %150 = vmatpush1.msra.mxu0 %v119
    %151 = vmatprep.subr.mxu0 0.0
    %152 = vmatpush1.msra.mxu0 %v120
    %153 = vmatprep.subr.mxu0 0.0
    %154 = vmatpush1.msra.mxu0 %v121
    %155 = vmatprep.subr.mxu0 0.0
    %156 = vmatpush1.msra.mxu0 %v122
    %157 = vmatprep.subr.mxu0 0.0
    %158 = vmatpush1.msra.mxu0 %v123
    %159 = vmatprep.subr.mxu0 0.0
    %160 = vmatpush1.msra.mxu0 %v124
    %161 = vmatprep.subr.mxu0 0.0
    %162 = vmatpush1.msra.mxu0 %v125
    %163 = vmatprep.subr.mxu0 0.0
    %164 = vmatpush1.msra.mxu0 %v126
    %165 = vmatprep.subr.mxu0 0.0
    %166 = vmatpush1.msra.mxu0 %v127
    %167 = vmatprep.subr.mxu0 0.0
    %168 = vmatpush1.msra.mxu0 0.0
    %169 = vmatprep.subr.mxu0 0.0
    %170 = vmatpush1.msra.mxu0 0.0
    %171 = vmatprep.subr.mxu0 0.0
    %172 = vmatpush1.msra.mxu0 0.0
    %173 = vmatprep.subr.mxu0 0.0
    %174 = vmatpush1.msra.mxu0 0.0
    %175 = vmatprep.subr.mxu0 0.0
    %176 = vmatpush1.msra.mxu0 0.0
    %177 = vmatprep.subr.mxu0 0.0
    %178 = vmatpush1.msra.mxu0 0.0
    %179 = vmatprep.subr.mxu0 0.0
    %180 = vmatpush1.msra.mxu0 0.0
    %181 = vmatprep.subr.mxu0 0.0
    %182 = vmatpush1.msra.mxu0 0.0
    %183 = vmatprep.subr.mxu0 0.0
    %184 = vmatpush1.msra.mxu0 0.0
    %185 = vmatprep.subr.mxu0 0.0
    %186 = vmatpush1.msra.mxu0 0.0
    %187 = vmatprep.subr.mxu0 0.0
    %188 = vmatpush1.msra.mxu0 0.0
    %189 = vmatprep.subr.mxu0 0.0
    %190 = vmatpush1.msra.mxu0 0.0
    %191 = vmatprep.subr.mxu0 0.0
    %192 = vmatpush1.msra.mxu0 0.0
    %193 = vmatprep.subr.mxu0 0.0
    %194 = vmatpush1.msra.mxu0 0.0
    %195 = vmatprep.subr.mxu0 0.0
    %196 = vmatpush1.msra.mxu0 0.0
    %197 = vmatprep.subr.mxu0 0.0
    %198 = vmatpush1.msra.mxu0 0.0
    %199 = vmatprep.mubr.f32.mxu0 0.0
    %200 = vmatmul.mubr.f32.gmra.mrb[0].mxu0 %v111
    %v201 = vpop.f32.mrb[0].mxu0
    %v202 = vadd.f32 %v133, %v201
    %v203 = vpop.f32.mrb[0].mxu0
    %204 = vdwg.mxu0
    %v205 = vmax.f32 %v202, 0.0
    %v206 = vld [vmem:[%s5] sm:$0xff]
    %v207 = vld [vmem:[%s5 + $0x8] sm:$0xff]
    %v208 = vld [vmem:[%s5 + $0x10] sm:$0xff]
    %v209 = vld [vmem:[%s5 + $0x18] sm:$0xff]
    %v210 = vld [vmem:[%s5 + $0x20] sm:$0xff]
    %v211 = vld [vmem:[%s5 + $0x28] sm:$0xff]
    %v212 = vld [vmem:[%s5 + $0x30] sm:$0xff]
    %v213 = vld [vmem:[%s5 + $0x38] sm:$0xff]
    %v214 = vld [vmem:[%s5 + $0x40] sm:$0xff]
    %v215 = vld [vmem:[%s5 + $0x48] sm:$0xff]
    %v216 = vld [vmem:[%s5 + $0x50] sm:$0xff]
    %v217 = vld [vmem:[%s5 + $0x58] sm:$0xff]
    %v218 = vld [vmem:[%s5 + $0x60] sm:$0xff]
    %v219 = vld [vmem:[%s5 + $0x68] sm:$0xff]
    %v220 = vld [vmem:[%s5 + $0x70] sm:$0xff]
    %v221 = vld [vmem:[%s5 + $0x78] sm:$0xff]
    %v222 = vld [vmem:[%s6] sm:$0x1]
    %v224 = vlaneseq
    %v225 = vshrl.u32 %v224, 7
    %v226 = vsub.s32 0, %v225
    %v227 = vrot.slane %v222, %v226
    %229 = vmatprep.subr.mxu0 0.0
    %230 = vmatpush1.msra.mxu0 %v206
    %231 = vmatprep.subr.mxu0 0.0
    %232 = vmatpush1.msra.mxu0 %v207
    %233 = vmatprep.subr.mxu0 0.0
    %234 = vmatpush1.msra.mxu0 %v208
    %235 = vmatprep.subr.mxu0 0.0
    %236 = vmatpush1.msra.mxu0 %v209
    %237 = vmatprep.subr.mxu0 0.0
    %238 = vmatpush1.msra.mxu0 %v210
    %239 = vmatprep.subr.mxu0 0.0
    %240 = vmatpush1.msra.mxu0 %v211
    %241 = vmatprep.subr.mxu0 0.0
    %242 = vmatpush1.msra.mxu0 %v212
    %243 = vmatprep.subr.mxu0 0.0
    %244 = vmatpush1.msra.mxu0 %v213
    %245 = vmatprep.subr.mxu0 0.0
    %246 = vmatpush1.msra.mxu0 %v214
    %247 = vmatprep.subr.mxu0 0.0
    %248 = vmatpush1.msra.mxu0 %v215
    %249 = vmatprep.subr.mxu0 0.0
    %250 = vmatpush1.msra.mxu0 %v216
    %251 = vmatprep.subr.mxu0 0.0
    %252 = vmatpush1.msra.mxu0 %v217
    %253 = vmatprep.subr.mxu0 0.0
    %254 = vmatpush1.msra.mxu0 %v218
    %255 = vmatprep.subr.mxu0 0.0
    %256 = vmatpush1.msra.mxu0 %v219
    %257 = vmatprep.subr.mxu0 0.0
    %258 = vmatpush1.msra.mxu0 %v220
    %259 = vmatprep.subr.mxu0 0.0
    %260 = vmatpush1.msra.mxu0 %v221
    %261 = vmatprep.subr.mxu0 0.0
    %262 = vmatpush1.msra.mxu0 0.0
    %263 = vmatprep.subr.mxu0 0.0
    %264 = vmatpush1.msra.mxu0 0.0
    %265 = vmatprep.subr.mxu0 0.0
    %266 = vmatpush1.msra.mxu0 0.0
    %267 = vmatprep.subr.mxu0 0.0
    %268 = vmatpush1.msra.mxu0 0.0
    %269 = vmatprep.subr.mxu0 0.0
    %270 = vmatpush1.msra.mxu0 0.0
    %271 = vmatprep.subr.mxu0 0.0
    %272 = vmatpush1.msra.mxu0 0.0
    %273 = vmatprep.subr.mxu0 0.0
    %274 = vmatpush1.msra.mxu0 0.0
    %275 = vmatprep.subr.mxu0 0.0
    %276 = vmatpush1.msra.mxu0 0.0
    %277 = vmatprep.subr.mxu0 0.0
    %278 = vmatpush1.msra.mxu0 0.0
    %279 = vmatprep.subr.mxu0 0.0
    %280 = vmatpush1.msra.mxu0 0.0
    %281 = vmatprep.subr.mxu0 0.0
    %282 = vmatpush1.msra.mxu0 0.0
    %283 = vmatprep.subr.mxu0 0.0
    %284 = vmatpush1.msra.mxu0 0.0
    %285 = vmatprep.subr.mxu0 0.0
    %286 = vmatpush1.msra.mxu0 0.0
    %287 = vmatprep.subr.mxu0 0.0
    %288 = vmatpush1.msra.mxu0 0.0
    %289 = vmatprep.subr.mxu0 0.0
    %290 = vmatpush1.msra.mxu0 0.0
    %291 = vmatprep.subr.mxu0 0.0
    %292 = vmatpush1.msra.mxu0 0.0
    %293 = vmatprep.mubr.f32.mxu0 0.0
    %294 = vmatmul.mubr.f32.gmra.mrb[0].mxu0 %v205
    %v295 = vpop.f32.mrb[0].mxu0
    %v296 = vadd.f32 %v227, %v295
    %v297 = vpop.f32.mrb[0].mxu0
    %298 = vdwg.mxu0
    %v299 = vmax.f32 %v296, 0.0
    %v300 = vadd.f32 %v299, 0.5
    %vm301 = vcmask 58368
    %302 = vst.msk [vmem:[#allocation2] sm:$0x3] %vm301, %v300
    // Predicated region
    $region30: #{actor_network_forward.1} parent=1 // pred_check
      _
    $region31: #{actor_network_forward.1} parent=1 // pred_check_branch
      %304 = sbr.rel (0) target = $region33
    $region32: #{actor_network_forward.1} parent=1 // pred_region
      %s306 = ssub.s32 32, 32
      %307 = vsyncadd [#allocation3], %s306
      %s309 = sshll.u32 [#allocation2], 4
      %s310 = int_to_ptr.vmem [resolvable:$true] %s309
      %312 = dma.vmem_to_hbm [thread:$0]  %s310, 32, %s7, [#allocation3]
    $region33: #{actor_network_forward.1} parent=1 // pred_fallthru
      _
    // Predicated region
    $region34: #{actor_network_forward.1} parent=1 // pred_check
      _
    $region35: #{actor_network_forward.1} parent=1 // pred_check_branch
      %314 = sbr.rel (0) target = $region37
    $region36: #{actor_network_forward.1} parent=1 // pred_region
      %315 = dma.done [#allocation3], 32
    $region37: #{actor_network_forward.1} parent=1 // pred_fallthru
      _
    %316 = vsyncpa [#allocation3], 1

</llo_original>
